<compile_context>
chip_gen: v6e
topology: v6e:2x2x1
jax: 0.10.0
libtpu: 0.0.40
codegen_flags: <defaults>
</compile_context>

<pallas_src>
import jax
import jax.numpy as jnp
from jax.experimental import pallas as pl
from jax.experimental.pallas import tpu as pltpu

_LANES = 128
_SUBLANES_32BIT = 8
_TARGET_CHUNK_BYTES = 2 * 1024 * 1024   # ~2 MiB per DMA chunk
_SMALL_BYTES = 1 * 1024 * 1024          # below this, skip the kernel entirely


def _row_multiple(dtype):
    """HBM row-tile multiple: 8 rows for 32-bit, 16 for bf16, 32 for int8/fp8."""
    itemsize = dtype.itemsize
    return max(_SUBLANES_32BIT, (_SUBLANES_32BIT * 4) // max(itemsize, 1))


def _hbm_copy_2d(x2):
    """Identity copy of a (rows, 128) slab as chunked direct HBM->HBM DMA.

    No VMEM staging: both refs live in pl.ANY (HBM); the kernel body only
    issues make_async_copy descriptors with two ping-ponged DMA semaphores,
    so there are no vld/vst ops and no scoped-VMEM pressure.
    """
    n_rows, lanes = x2.shape
    itemsize = x2.dtype.itemsize
    row_mult = _row_multiple(x2.dtype)
    bytes_per_row = lanes * itemsize

    # ~2 MiB chunks, aligned to the dtype's row-tile multiple, capped at the
    # whole array.  n_full >= 1 whenever n_rows >= 1.
    chunk_rows = max(row_mult, _TARGET_CHUNK_BYTES // bytes_per_row)
    chunk_rows -= chunk_rows % row_mult
    chunk_rows = min(chunk_rows, n_rows)

    n_full = n_rows // chunk_rows
    tail_rows = n_rows - n_full * chunk_rows
    aligned_chunks = (chunk_rows % row_mult) == 0
    nbytes = n_rows * lanes * itemsize

    def kernel(x_hbm, o_hbm, sem):
        def full_chunk(c, slot):
            start = c * chunk_rows
            if aligned_chunks:
                start = pl.multiple_of(start, row_mult)
            return pltpu.make_async_copy(
                x_hbm.at[pl.ds(start, chunk_rows), :],
                o_hbm.at[pl.ds(start, chunk_rows), :],
                sem.at[slot])

        # Keep up to two full-chunk DMAs in flight (ping-pong semaphores).
        full_chunk(0, 0).start()
        if n_full >= 2:
            full_chunk(1, 1).start()

        @pl.loop(0, n_full)
        def _(c):
            slot = c & 1
            full_chunk(c, slot).wait()

            @pl.when(c + 2 < n_full)
            def _():
                full_chunk(c + 2, slot).start()

        if tail_rows > 0:
            tail_start = n_full * chunk_rows
            tail = pltpu.make_async_copy(
                x_hbm.at[pl.ds(tail_start, tail_rows), :],
                o_hbm.at[pl.ds(tail_start, tail_rows), :],
                sem.at[0])
            tail.start()
            tail.wait()

    return pl.pallas_call(
        kernel,
        out_shape=jax.ShapeDtypeStruct((n_rows, lanes), x2.dtype),
        in_specs=[pl.BlockSpec(memory_space=pl.ANY)],
        out_specs=pl.BlockSpec(memory_space=pl.ANY),
        scratch_shapes=[pltpu.SemaphoreType.DMA((2,))],
        cost_estimate=pl.CostEstimate(
            flops=0, transcendentals=0, bytes_accessed=2 * nbytes),
    )(x2)


def _identity_copy(x, *, force_kernel=False):
    """Identity copy via direct HBM->HBM DMA; small inputs skip the kernel."""
    total = x.size
    if total == 0:
        return x
    nbytes = total * x.dtype.itemsize
    if not force_kernel and nbytes < _SMALL_BYTES:
        # Identity needs zero bytes moved: zero launches on the small path.
        return x
    if total % _LANES == 0:
        y2 = _hbm_copy_2d(x.reshape(total // _LANES, _LANES))
        return y2.reshape(x.shape)
    # Ragged total: DMA-copy the largest 128-multiple prefix (lane-dense),
    # stitch the remainder with plain jnp.  No (1, N) full-extent block.
    head = (total // _LANES) * _LANES
    if head == 0:
        return x  # fewer than 128 elements: nothing worth launching
    flat = x.reshape(total)
    y_head = _hbm_copy_2d(
        flat[:head].reshape(head // _LANES, _LANES)).reshape(head)
    return jnp.concatenate([y_head, flat[head:]]).reshape(x.shape)


class DefaultUnderstander:
    """JAX/Pallas port of the (empty) PyTorch DefaultUnderstander module."""

    def __init__(self):
        # No parameters in the reference module.
        pass

    def forward(self, inputs):
        # TODO(synk): the reference forward() body is `pass` (returns None);
        # there is no computation to translate, so no kernel is launched —
        # zero HBM traffic, zero launches is the optimal implementation.
        return None

    def __call__(self, inputs):
        return self.forward(inputs)

    # Optional verification path exercising the Pallas HBM->HBM DMA copy.
    def forward_with_copy(self, inputs, *, force_kernel=False):
        return _identity_copy(inputs, force_kernel=force_kernel)


if __name__ == "__main__":
    key = jax.random.PRNGKey(0)

    # Small NCHW input consistent with a typical image-like module input.
    x = jax.random.normal(key, (2, 4, 16, 16), dtype=jnp.float32)

    model = DefaultUnderstander()

    # Semantics of the reference module: forward() returns None, no kernel.
    assert model.forward(x) is None

    # Small-input hot path: identity short-circuits with zero launches.
    y_fast = model.forward_with_copy(x)
    assert y_fast is x

    # Exercise the Pallas HBM->HBM DMA copy kernel once on the small input.
    y = jax.block_until_ready(model.forward_with_copy(x, force_kernel=True))
    assert y.shape == x.shape and y.dtype == x.dtype
    assert bool(jnp.all(y == x))

    # Exercise the multi-chunk ping-pong + row-tail path on a larger slab
    # (2 full 4096-row chunks + a 16-row tail, ~4.2 MiB > short-circuit limit).
    key2 = jax.random.fold_in(key, 1)
    big = jax.random.normal(key2, (2 * 4096 + 16, 128), dtype=jnp.float32)
    y_big = jax.block_until_ready(model.forward_with_copy(big))
    assert bool(jnp.array_equal(y_big, big))

    print("KERNEL_OK")
</pallas_src>

<mosaic_0001>
module attributes {stable_mosaic.version = 11 : i64} {
  func.func @kernel(%arg0: memref<16x128xf32, #tpu.memory_space<any>>, %arg1: memref<16x128xf32, #tpu.memory_space<any>>, %arg2: memref<2x!tpu.dma_semaphore, #tpu.memory_space<semaphore_mem>>) attributes {dimension_semantics = [], scalar_prefetch = 0 : i64, scratch_operands = 1 : i64, tpu.core_type = #tpu.core_type<tc>} {
    %c0_i32 = arith.constant 0 : i32
    %0 = tpu.assume_multiple %c0_i32, 8 : i32
    %c0_i32_0 = arith.constant 0 : i32
    %c0_i32_1 = arith.constant 0 : i32
    %1 = tpu.memref_slice %arg0[%0, %c0_i32_1] : memref<16x128xf32, #tpu.memory_space<any>> -> memref<16x128xf32, #tpu.memory_space<any>>
    %c0_i32_2 = arith.constant 0 : i32
    %2 = tpu.memref_slice %arg1[%0, %c0_i32_2] : memref<16x128xf32, #tpu.memory_space<any>> -> memref<16x128xf32, #tpu.memory_space<any>>
    %3 = tpu.memref_slice %arg2[%c0_i32_0] : memref<2x!tpu.dma_semaphore, #tpu.memory_space<semaphore_mem>> -> memref<1x!tpu.dma_semaphore, #tpu.memory_space<semaphore_mem>>
    %4 = tpu.memref_squeeze %3 : memref<1x!tpu.dma_semaphore, #tpu.memory_space<semaphore_mem>> -> memref<!tpu.dma_semaphore, #tpu.memory_space<semaphore_mem>>
    tpu.enqueue_dma source(%1 : memref<16x128xf32, #tpu.memory_space<any>>) target(%2 : memref<16x128xf32, #tpu.memory_space<any>>) target_semaphore(%4 : memref<!tpu.dma_semaphore, #tpu.memory_space<semaphore_mem>>)
    %c0_i32_3 = arith.constant 0 : i32
    %c1_i32 = arith.constant 1 : i32
    %5 = arith.muli %c0_i32_3, %c1_i32 : i32
    %c0_i32_4 = arith.constant 0 : i32
    %6 = arith.addi %c0_i32_4, %5 : i32
    %c1_i32_5 = arith.constant 1 : i32
    %7 = arith.andi %6, %c1_i32_5 : i32
    %c16_i32 = arith.constant 16 : i32
    %8 = arith.muli %6, %c16_i32 : i32
    %9 = tpu.assume_multiple %8, 8 : i32
    %c0_i32_6 = arith.constant 0 : i32
    %10 = tpu.memref_slice %arg0[%9, %c0_i32_6] : memref<16x128xf32, #tpu.memory_space<any>> -> memref<16x128xf32, #tpu.memory_space<any>>
    %c0_i32_7 = arith.constant 0 : i32
    %11 = tpu.memref_slice %arg1[%9, %c0_i32_7] : memref<16x128xf32, #tpu.memory_space<any>> -> memref<16x128xf32, #tpu.memory_space<any>>
    %12 = tpu.memref_slice %arg2[%7] : memref<2x!tpu.dma_semaphore, #tpu.memory_space<semaphore_mem>> -> memref<1x!tpu.dma_semaphore, #tpu.memory_space<semaphore_mem>>
    %13 = tpu.memref_squeeze %12 : memref<1x!tpu.dma_semaphore, #tpu.memory_space<semaphore_mem>> -> memref<!tpu.dma_semaphore, #tpu.memory_space<semaphore_mem>>
    tpu.wait_dma2 semaphore(%13 : memref<!tpu.dma_semaphore, #tpu.memory_space<semaphore_mem>>) src(%10 : memref<16x128xf32, #tpu.memory_space<any>>) dst(%11 : memref<16x128xf32, #tpu.memory_space<any>>)
    %c2_i32 = arith.constant 2 : i32
    %14 = arith.addi %6, %c2_i32 : i32
    %c1_i32_8 = arith.constant 1 : i32
    %15 = arith.cmpi slt, %14, %c1_i32_8 : i32
    %16 = arith.extui %15 : i1 to i32
    %c0_i32_9 = arith.constant 0 : i32
    %17 = arith.cmpi ne, %16, %c0_i32_9 : i32
    scf.if %17 {
      %c2_i32_11 = arith.constant 2 : i32
      %18 = arith.addi %6, %c2_i32_11 : i32
      %c16_i32_12 = arith.constant 16 : i32
      %19 = arith.muli %18, %c16_i32_12 : i32
      %20 = tpu.assume_multiple %19, 8 : i32
      %c0_i32_13 = arith.constant 0 : i32
      %21 = tpu.memref_slice %arg0[%20, %c0_i32_13] : memref<16x128xf32, #tpu.memory_space<any>> -> memref<16x128xf32, #tpu.memory_space<any>>
      %c0_i32_14 = arith.constant 0 : i32
      %22 = tpu.memref_slice %arg1[%20, %c0_i32_14] : memref<16x128xf32, #tpu.memory_space<any>> -> memref<16x128xf32, #tpu.memory_space<any>>
      %23 = tpu.memref_slice %arg2[%7] : memref<2x!tpu.dma_semaphore, #tpu.memory_space<semaphore_mem>> -> memref<1x!tpu.dma_semaphore, #tpu.memory_space<semaphore_mem>>
      %24 = tpu.memref_squeeze %23 : memref<1x!tpu.dma_semaphore, #tpu.memory_space<semaphore_mem>> -> memref<!tpu.dma_semaphore, #tpu.memory_space<semaphore_mem>>
      tpu.enqueue_dma source(%21 : memref<16x128xf32, #tpu.memory_space<any>>) target(%22 : memref<16x128xf32, #tpu.memory_space<any>>) target_semaphore(%24 : memref<!tpu.dma_semaphore, #tpu.memory_space<semaphore_mem>>)
    } else {
    }
    %c1_i32_10 = arith.constant 1 : i32
    return
  }
}

</mosaic_0001>

<llo_original>
// kernel: tpu_custom_call.1
$region0: #{tpu_custom_call.1}
  #allocation0 [shape = 'u32[]', space=smem, size = 0x4, offset = 0x4, fixed_abs, tag = 'smem constant byte address 0x4 - core index']
  #allocation1 [shape = 'u32[144,128]{1,0:T(1,128)}', space=vmem, size = 0x12000, scoped, tag = 'internal scratch']
  #allocation2 [shape = 's32[2]{0}', space=sflag, size = 0x8, scoped, tag = 'scratch operand']
  #allocation3 [shape = 's32[]', space=sflag, size = 0x4, offset = 0, fixed_abs, tag = 'sflag constant byte address 0x0 - dummy sync flag']
  #allocation4 [shape = 'u32[0]{0}', space=smem, size = 0, offset = 0, fixed_abs, tag = 'smem constant byte address 0x0 - null']
  %s0 = inlined_call_operand.hbm [shape: f32[16,128], index: 0, kind: input, shape index: {}]
  %s1 = inlined_call_operand.hbm [shape: f32[16,128], index: 1, kind: output, shape index: {}]
  %s2 = sld [smem:[#allocation0]]
  $region2: #{tpu_custom_call.1} parent=0
    _
  %s4 = ssub.s32 1, %s2
  %s5 = scalar_select 0, %s4, %s2
  %s7 = sshll.u32 1, 14
  %s8 = sxor.u32 4294967295, %s7
  %12 = dma.general %s0, 256, %s1, [#allocation2], 131072, [#allocation4], 0, 0
  %s13 = smul.u32 16, 1
  %s14 = sshll.u32 %s13, 4
  %15 = dma.done [#allocation2], %s14
  %16 = vsyncmov [#allocation2]
  %s17 = vpop.sfrf %16
  %p18 = scmp.eq.s32.totalorder %s17, 0
  %p19 = pneg %p18
  %21 = shalt.err (%p19)
  %s22 = scalar_lea.sflag [#allocation2], 1
  %23 = vsyncmov %s22
  %s24 = vpop.sfrf %23
  %p25 = scmp.eq.s32.totalorder %s24, 0
  %p26 = pneg %p25
  %28 = shalt.err (%p26)

</llo_original>
